<compile_context>
chip_gen: v6e
topology: v6e:2x2x1
jax: 0.10.0
libtpu: 0.0.40
codegen_flags: <defaults>
</compile_context>

<pallas_src>
import functools

import jax
import jax.numpy as jnp
import numpy as np
from jax.experimental import pallas as pl
from jax.experimental.pallas import tpu as pltpu

# Luma weights used by torchvision.transforms.Grayscale (ITU-R 601-2 / PIL "L").
_LUMA_R, _LUMA_G, _LUMA_B = 0.299, 0.587, 0.114


def _round_up(x, m):
    return (x + m - 1) // m * m


def _vmem_capacity_bytes():
    """Physical VMEM of this TPU generation (fallback: 64 MiB = smallest
    per-core VMEM across v5e/v6e/v7x)."""
    try:
        return int(pltpu.get_tpu_info().vmem_capacity_bytes)
    except Exception:
        return 64 * 1024 * 1024


def _vmem_footprint(tile_h, h, w):
    """Rough per-step VMEM need: double-buffered in/out blocks + luma scratch
    + slack for vreg-spilled live value planes."""
    halo = min(8, h)
    w_pad = _round_up(w, 128)
    blocks = 2 * (3 * tile_h * w + 2 * 3 * halo * w + tile_h * w) * 4
    scratch = (tile_h + 2) * w_pad * 4
    live = 4 * tile_h * w_pad * 4
    return blocks + scratch + live


def _pick_tile_h(h, w):
    """Row-tile height: largest multiple-of-8 divisor of H (capped at 512)
    whose footprint fits ~70% of this generation's VMEM, preferring an even
    tile count so v7x's two TensorCores split the grid evenly."""
    if h % 8 != 0:
        # TODO(synk): H not a multiple of 8 falls back to a single row tile.
        return h
    budget = int(_vmem_capacity_bytes() * 0.7)
    cands = [t for t in range(8, min(h, 512) + 1, 8)
             if h % t == 0 and _vmem_footprint(t, h, w) <= budget]
    if not cands:
        return 8
    best = max(cands)
    even = [t for t in cands if (h // t) % 2 == 0]
    if even and 2 * max(even) >= best:   # take the even split unless it costs >2x
        return max(even)
    return best


def _entropy_kernel(rgb_ref, top_ref, bot_ref, o_ref, luma_sc,
                    *, tile_h, w, w_pad, halo):
    """One row tile: gray = luma(RGB); out = 3x3 all-ones conv, zero padded."""
    i = pl.program_id(0)
    n = pl.num_programs(0)

    # --- Fused Grayscale(): ITU-R 601-2 luma, computed in VMEM ---------------
    gray = (_LUMA_R * rgb_ref[0] + _LUMA_G * rgb_ref[1]
            + _LUMA_B * rgb_ref[2])                                 # (T, W)

    # Halo rows for conv2d padding=1: the row just above / below this tile,
    # zeroed at the image borders (conv zero padding).
    top = (_LUMA_R * top_ref[0, halo - 1:halo, :]
           + _LUMA_G * top_ref[1, halo - 1:halo, :]
           + _LUMA_B * top_ref[2, halo - 1:halo, :])                # (1, W)
    bot = (_LUMA_R * bot_ref[0, 0:1, :]
           + _LUMA_G * bot_ref[1, 0:1, :]
           + _LUMA_B * bot_ref[2, 0:1, :])                          # (1, W)
    top = jnp.where(i > 0, top, 0.0)
    bot = jnp.where(i < n - 1, bot, 0.0)

    # --- Stage the halo-extended luma plane in VMEM --------------------------
    if w_pad > w:
        # W % 128 != 0: zero just the narrow lane-pad strip (<= 127 lanes) so
        # the horizontal rolls wrap onto zeros.  Replaces the old full-plane
        # iota/compare/select mask; done every step so it is megacore-safe.
        luma_sc[0:tile_h + 2, w:w_pad] = jnp.zeros(
            (tile_h + 2, w_pad - w), jnp.float32)
    luma_sc[0:1, 0:w] = top
    luma_sc[1:tile_h + 1, 0:w] = gray
    luma_sc[tile_h + 1:tile_h + 2, 0:w] = bot

    # --- Vertical 3-row sum (sublane-shifted reads of one staged plane) ------
    # TODO(synk): a vreg-resident variant (sublane rolls of `gray`) would skip
    # this VMEM round-trip; kept staged since the kernel is HBM-bound.
    v = (luma_sc[0:tile_h, :]
         + luma_sc[1:tile_h + 1, :]
         + luma_sc[2:tile_h + 2, :])                                # (T, Wp)

    # --- Horizontal 3-sum on the XLU (lane rolls) -----------------------------
    out = v + pltpu.roll(v, 1, axis=1) + pltpu.roll(v, w_pad - 1, axis=1)
    o_ref[...] = out[:, :w]

    if w_pad == w:
        # Lane-aligned width: no zero pad column exists, so the two rolls
        # wrapped real data into columns 0 and W-1.  Rewrite just those two
        # output columns from first principles (narrow loads/stores only).
        def vcol(j):
            return (luma_sc[0:tile_h, j:j + 1]
                    + luma_sc[1:tile_h + 1, j:j + 1]
                    + luma_sc[2:tile_h + 2, j:j + 1])               # (T, 1)
        o_ref[:, 0:1] = vcol(0) + vcol(1)
        o_ref[:, w - 1:w] = vcol(w - 2) + vcol(w - 1)


def entropy_debug_forward(img_rgb, tile_h=None):
    """img_rgb: float32 (3, H, W) in [0, 1] (what ToTensor yields for RGB).

    Returns (1, 1, H, W) float32, matching
        conv2d(gray.unsqueeze(0).unsqueeze(0), ones(1, 1, 3, 3),
               stride=[1, 1], padding=1)
    where gray = Grayscale()(img) kept in float precision.
    """
    # TODO(synk): PIL's Grayscale rounds the luma to uint8 before ToTensor; we
    # keep float precision (documented deviation from the PyTorch pipeline).
    img_rgb = jnp.asarray(img_rgb, jnp.float32)
    c, h, w = img_rgb.shape
    if c != 3:
        raise ValueError("expected a (3, H, W) RGB tensor")

    if tile_h is None:
        tile_h = _pick_tile_h(h, w)
    if h % tile_h != 0 or (tile_h != h and tile_h % 8 != 0):
        raise ValueError("tile_h must divide H and be a multiple of 8")

    n_tiles = h // tile_h
    halo = min(8, h)                    # row extent of the halo neighbour blocks
    n_halo_blocks = pl.cdiv(h, halo)
    blocks_per_tile = tile_h // halo    # exact whenever n_tiles > 1
    w_pad = _round_up(w, 128)           # scratch / compute width (lane aligned)

    kernel = functools.partial(
        _entropy_kernel, tile_h=tile_h, w=w, w_pad=w_pad, halo=halo)

    # Advisory cost: HBM-bound (read 3 channels + halo blocks, write 1 plane).
    cost = pl.CostEstimate(
        flops=10 * h * w,
        transcendentals=0,
        bytes_accessed=(3 * h * w + 2 * 3 * halo * w * n_tiles + h * w) * 4)

    # Derive the scoped-VMEM limit from the actual footprint (not a fixed cap).
    vmem_limit = min(int(_vmem_capacity_bytes() * 0.9),
                     max(_vmem_footprint(tile_h, h, w), 32 * 1024 * 1024))

    # TODO(synk): on single-core chips (v5e/v6e) the top halo equals the
    # previous tile's last row and could be cached in persistent scratch
    # instead of re-DMA'd; skipped to keep the row axis "parallel" for v7x.
    out = pl.pallas_call(
        kernel,
        out_shape=jax.ShapeDtypeStruct((h, w), jnp.float32),
        grid=(n_tiles,),
        in_specs=[
            # Main row tile of the RGB image.
            pl.BlockSpec((3, tile_h, w), lambda i: (0, i, 0)),
            # 8-row neighbour blocks supplying the one-row halos.  Indices are
            # clamped at the image borders; the kernel zeroes them there.
            pl.BlockSpec(
                (3, halo, w),
                lambda i: (0, jnp.maximum(i * blocks_per_tile - 1, 0), 0)),
            pl.BlockSpec(
                (3, halo, w),
                lambda i: (0, jnp.minimum((i + 1) * blocks_per_tile,
                                          n_halo_blocks - 1), 0)),
        ],
        # Output written directly as (H, W): last block dim == full array dim,
        # so no lane padding and no post-kernel slice copy in XLA.
        out_specs=pl.BlockSpec((tile_h, w), lambda i: (i, 0)),
        scratch_shapes=[pltpu.VMEM((tile_h + 2, w_pad), jnp.float32)],
        compiler_params=pltpu.CompilerParams(
            # Row tiles are independent -> shard across v7x's two TensorCores;
            # neutral on single-core v5e/v6e.
            dimension_semantics=("parallel",),
            vmem_limit_bytes=vmem_limit,
        ),
        cost_estimate=cost,
    )(img_rgb, img_rgb, img_rgb)

    # Reshape to the conv2d (1, 1, H, W) layout (no data movement).
    return out[None, None]


def _reference(img_rgb):
    gray = (_LUMA_R * img_rgb[0] + _LUMA_G * img_rgb[1] + _LUMA_B * img_rgb[2])
    return jax.lax.conv_general_dilated(
        gray[None, None], jnp.ones((1, 1, 3, 3), jnp.float32),
        window_strides=(1, 1), padding=((1, 1), (1, 1)),
        dimension_numbers=("NCHW", "OIHW", "NCHW"))


if __name__ == "__main__":
    key = jax.random.PRNGKey(0)
    k1, k2, k3 = jax.random.split(key, 3)

    # Case 1: small RGB image, W=16 not lane aligned (padded-scratch path);
    # auto tile picker -> two 8-row tiles, exercising the halo exchange.
    img1 = jax.random.uniform(k1, (3, 16, 16), dtype=jnp.float32)
    out1 = jax.block_until_ready(entropy_debug_forward(img1))
    assert out1.shape == (1, 1, 16, 16), out1.shape
    np.testing.assert_allclose(np.asarray(out1), np.asarray(_reference(img1)),
                               rtol=1e-5, atol=1e-5)

    # Case 2: explicit 8-row tiles (three of them) with a lane-aligned W=128
    # (exercises the aligned path with the roll-wrap column rewrite).
    img2 = jax.random.uniform(k2, (3, 24, 128), dtype=jnp.float32)
    out2 = jax.block_until_ready(entropy_debug_forward(img2, tile_h=8))
    assert out2.shape == (1, 1, 24, 128), out2.shape
    np.testing.assert_allclose(np.asarray(out2), np.asarray(_reference(img2)),
                               rtol=1e-5, atol=1e-5)

    # Case 3: auto tile picker on an aligned multi-vreg width (W=256); picks
    # two 16-row tiles (even tile count for megacore balance).
    img3 = jax.random.uniform(k3, (3, 32, 256), dtype=jnp.float32)
    out3 = jax.block_until_ready(entropy_debug_forward(img3))
    assert out3.shape == (1, 1, 32, 256), out3.shape
    np.testing.assert_allclose(np.asarray(out3), np.asarray(_reference(img3)),
                               rtol=1e-5, atol=1e-5)

    print("KERNEL_OK")
</pallas_src>

<mosaic_0001>
module attributes {stable_mosaic.version = 11 : i64} {
  func.func @_entropy_kernel(%arg0: i32, %arg1: memref<3x8x16xf32, #tpu.memory_space<vmem>>, %arg2: memref<3x8x16xf32, #tpu.memory_space<vmem>>, %arg3: memref<3x8x16xf32, #tpu.memory_space<vmem>>, %arg4: memref<8x16xf32, #tpu.memory_space<vmem>>, %arg5: memref<10x128xf32, #tpu.memory_space<vmem>>) attributes {dimension_semantics = [#tpu.dimension_semantics<parallel>], iteration_bounds = array<i64: 2>, scalar_prefetch = 0 : i64, scratch_operands = 1 : i64, tpu.core_type = #tpu.core_type<tc>, window_params = [{transform_indices = @transform_0, window_bounds = array<i64: 3, 8, 16>}, {transform_indices = @transform_1, window_bounds = array<i64: 3, 8, 16>}, {transform_indices = @transform_2, window_bounds = array<i64: 3, 8, 16>}, {transform_indices = @transform_3, window_bounds = array<i64: 8, 16>}]} {
    %c0 = arith.constant 0 : index
    %c0_0 = arith.constant 0 : index
    %c0_1 = arith.constant 0 : index
    %0 = vector.load %arg1[%c0, %c0_0, %c0_1] : memref<3x8x16xf32, #tpu.memory_space<vmem>>, vector<1x8x16xf32>
    %1 = vector.shape_cast %0 : vector<1x8x16xf32> to vector<8x16xf32>
    %cst = arith.constant 2.990000e-01 : f32
    %2 = vector.broadcast %cst : f32 to vector<8x16xf32>
    %3 = arith.mulf %2, %1 : vector<8x16xf32>
    %c1 = arith.constant 1 : index
    %c0_2 = arith.constant 0 : index
    %c0_3 = arith.constant 0 : index
    %4 = vector.load %arg1[%c1, %c0_2, %c0_3] : memref<3x8x16xf32, #tpu.memory_space<vmem>>, vector<1x8x16xf32>
    %5 = vector.shape_cast %4 : vector<1x8x16xf32> to vector<8x16xf32>
    %cst_4 = arith.constant 5.870000e-01 : f32
    %6 = vector.broadcast %cst_4 : f32 to vector<8x16xf32>
    %7 = arith.mulf %6, %5 : vector<8x16xf32>
    %8 = arith.addf %3, %7 : vector<8x16xf32>
    %c2 = arith.constant 2 : index
    %c0_5 = arith.constant 0 : index
    %c0_6 = arith.constant 0 : index
    %9 = vector.load %arg1[%c2, %c0_5, %c0_6] : memref<3x8x16xf32, #tpu.memory_space<vmem>>, vector<1x8x16xf32>
    %10 = vector.shape_cast %9 : vector<1x8x16xf32> to vector<8x16xf32>
    %cst_7 = arith.constant 1.140000e-01 : f32
    %11 = vector.broadcast %cst_7 : f32 to vector<8x16xf32>
    %12 = arith.mulf %11, %10 : vector<8x16xf32>
    %13 = arith.addf %8, %12 : vector<8x16xf32>
    %c0_8 = arith.constant 0 : index
    %c7 = arith.constant 7 : index
    %c0_9 = arith.constant 0 : index
    %14 = vector.load %arg2[%c0_8, %c7, %c0_9] : memref<3x8x16xf32, #tpu.memory_space<vmem>>, vector<1x1x16xf32>
    %15 = vector.shape_cast %14 : vector<1x1x16xf32> to vector<1x16xf32>
    %cst_10 = arith.constant 2.990000e-01 : f32
    %16 = vector.broadcast %cst_10 : f32 to vector<1x16xf32>
    %17 = arith.mulf %16, %15 : vector<1x16xf32>
    %c1_11 = arith.constant 1 : index
    %c7_12 = arith.constant 7 : index
    %c0_13 = arith.constant 0 : index
    %18 = vector.load %arg2[%c1_11, %c7_12, %c0_13] : memref<3x8x16xf32, #tpu.memory_space<vmem>>, vector<1x1x16xf32>
    %19 = vector.shape_cast %18 : vector<1x1x16xf32> to vector<1x16xf32>
    %cst_14 = arith.constant 5.870000e-01 : f32
    %20 = vector.broadcast %cst_14 : f32 to vector<1x16xf32>
    %21 = arith.mulf %20, %19 : vector<1x16xf32>
    %22 = arith.addf %17, %21 : vector<1x16xf32>
    %c2_15 = arith.constant 2 : index
    %c7_16 = arith.constant 7 : index
    %c0_17 = arith.constant 0 : index
    %23 = vector.load %arg2[%c2_15, %c7_16, %c0_17] : memref<3x8x16xf32, #tpu.memory_space<vmem>>, vector<1x1x16xf32>
    %24 = vector.shape_cast %23 : vector<1x1x16xf32> to vector<1x16xf32>
    %cst_18 = arith.constant 1.140000e-01 : f32
    %25 = vector.broadcast %cst_18 : f32 to vector<1x16xf32>
    %26 = arith.mulf %25, %24 : vector<1x16xf32>
    %27 = arith.addf %22, %26 : vector<1x16xf32>
    %c0_19 = arith.constant 0 : index
    %c0_20 = arith.constant 0 : index
    %c0_21 = arith.constant 0 : index
    %28 = vector.load %arg3[%c0_19, %c0_20, %c0_21] : memref<3x8x16xf32, #tpu.memory_space<vmem>>, vector<1x1x16xf32>
    %29 = vector.shape_cast %28 : vector<1x1x16xf32> to vector<1x16xf32>
    %cst_22 = arith.constant 2.990000e-01 : f32
    %30 = vector.broadcast %cst_22 : f32 to vector<1x16xf32>
    %31 = arith.mulf %30, %29 : vector<1x16xf32>
    %c1_23 = arith.constant 1 : index
    %c0_24 = arith.constant 0 : index
    %c0_25 = arith.constant 0 : index
    %32 = vector.load %arg3[%c1_23, %c0_24, %c0_25] : memref<3x8x16xf32, #tpu.memory_space<vmem>>, vector<1x1x16xf32>
    %33 = vector.shape_cast %32 : vector<1x1x16xf32> to vector<1x16xf32>
    %cst_26 = arith.constant 5.870000e-01 : f32
    %34 = vector.broadcast %cst_26 : f32 to vector<1x16xf32>
    %35 = arith.mulf %34, %33 : vector<1x16xf32>
    %36 = arith.addf %31, %35 : vector<1x16xf32>
    %c2_27 = arith.constant 2 : index
    %c0_28 = arith.constant 0 : index
    %c0_29 = arith.constant 0 : index
    %37 = vector.load %arg3[%c2_27, %c0_28, %c0_29] : memref<3x8x16xf32, #tpu.memory_space<vmem>>, vector<1x1x16xf32>
    %38 = vector.shape_cast %37 : vector<1x1x16xf32> to vector<1x16xf32>
    %cst_30 = arith.constant 1.140000e-01 : f32
    %39 = vector.broadcast %cst_30 : f32 to vector<1x16xf32>
    %40 = arith.mulf %39, %38 : vector<1x16xf32>
    %41 = arith.addf %36, %40 : vector<1x16xf32>
    %c0_i32 = arith.constant 0 : i32
    %42 = arith.cmpi sgt, %arg0, %c0_i32 : i32
    %cst_31 = arith.constant 0.000000e+00 : f32
    %43 = vector.broadcast %cst_31 : f32 to vector<1x16xf32>
    %44 = arith.select %42, %27, %43 : vector<1x16xf32>
    %c1_i32 = arith.constant 1 : i32
    %45 = arith.cmpi slt, %arg0, %c1_i32 : i32
    %cst_32 = arith.constant 0.000000e+00 : f32
    %46 = vector.broadcast %cst_32 : f32 to vector<1x16xf32>
    %47 = arith.select %45, %41, %46 : vector<1x16xf32>
    %cst_33 = arith.constant 0.000000e+00 : f32
    %48 = vector.broadcast %cst_33 : f32 to vector<10x112xf32>
    %c0_34 = arith.constant 0 : index
    %c16 = arith.constant 16 : index
    %49 = vector.load %arg5[%c0_34, %c16] : memref<10x128xf32, #tpu.memory_space<vmem>>, vector<10x112xf32>
    tpu.vector_store %arg5[%c0_34, %c16], %48 {strides = array<i32>} : memref<10x128xf32, #tpu.memory_space<vmem>>, vector<10x112xf32>,
    %c0_35 = arith.constant 0 : index
    %c0_36 = arith.constant 0 : index
    %50 = vector.load %arg5[%c0_35, %c0_36] : memref<10x128xf32, #tpu.memory_space<vmem>>, vector<1x16xf32>
    tpu.vector_store %arg5[%c0_35, %c0_36], %44 {strides = array<i32>} : memref<10x128xf32, #tpu.memory_space<vmem>>, vector<1x16xf32>,
    %c1_37 = arith.constant 1 : index
    %c0_38 = arith.constant 0 : index
    %51 = vector.load %arg5[%c1_37, %c0_38] : memref<10x128xf32, #tpu.memory_space<vmem>>, vector<8x16xf32>
    tpu.vector_store %arg5[%c1_37, %c0_38], %13 {strides = array<i32>} : memref<10x128xf32, #tpu.memory_space<vmem>>, vector<8x16xf32>,
    %c9 = arith.constant 9 : index
    %c0_39 = arith.constant 0 : index
    %52 = vector.load %arg5[%c9, %c0_39] : memref<10x128xf32, #tpu.memory_space<vmem>>, vector<1x16xf32>
    tpu.vector_store %arg5[%c9, %c0_39], %47 {strides = array<i32>} : memref<10x128xf32, #tpu.memory_space<vmem>>, vector<1x16xf32>,
    %c0_40 = arith.constant 0 : index
    %c0_41 = arith.constant 0 : index
    %53 = vector.load %arg5[%c0_40, %c0_41] : memref<10x128xf32, #tpu.memory_space<vmem>>, vector<8x128xf32>
    %c1_42 = arith.constant 1 : index
    %c0_43 = arith.constant 0 : index
    %54 = vector.load %arg5[%c1_42, %c0_43] : memref<10x128xf32, #tpu.memory_space<vmem>>, vector<8x128xf32>
    %55 = arith.addf %53, %54 : vector<8x128xf32>
    %c2_44 = arith.constant 2 : index
    %c0_45 = arith.constant 0 : index
    %56 = vector.load %arg5[%c2_44, %c0_45] : memref<10x128xf32, #tpu.memory_space<vmem>>, vector<8x128xf32>
    %57 = arith.addf %55, %56 : vector<8x128xf32>
    %c1_i32_46 = arith.constant 1 : i32
    %58 = tpu.dynamic_rotate %57 by %c1_i32_46 dim 1 : vector<8x128xf32>, i32 -> vector<8x128xf32>
    %59 = arith.addf %57, %58 : vector<8x128xf32>
    %c127_i32 = arith.constant 127 : i32
    %60 = tpu.dynamic_rotate %57 by %c127_i32 dim 1 : vector<8x128xf32>, i32 -> vector<8x128xf32>
    %61 = arith.addf %59, %60 : vector<8x128xf32>
    %62 = vector.extract_strided_slice %61 {offsets = [0, 0], sizes = [8, 16], strides = [1, 1]} : vector<8x128xf32> to vector<8x16xf32>
    %c0_47 = arith.constant 0 : index
    %c0_48 = arith.constant 0 : index
    %63 = vector.load %arg4[%c0_47, %c0_48] : memref<8x16xf32, #tpu.memory_space<vmem>>, vector<8x16xf32>
    tpu.vector_store %arg4[%c0_47, %c0_48], %62 {strides = array<i32>} : memref<8x16xf32, #tpu.memory_space<vmem>>, vector<8x16xf32>,
    return
  }
  func.func @transform_0(%arg0: i32) -> (i32, i32, i32) {
    %c0_i32 = arith.constant 0 : i32
    %c0_i32_0 = arith.constant 0 : i32
    %c0_i32_1 = arith.constant 0 : i32
    return %c0_i32, %arg0, %c0_i32_0 : i32, i32, i32
  }
  func.func @transform_1(%arg0: i32) -> (i32, i32, i32) {
    %c1_i32 = arith.constant 1 : i32
    %0 = arith.muli %arg0, %c1_i32 : i32
    %c1_i32_0 = arith.constant 1 : i32
    %1 = arith.subi %0, %c1_i32_0 : i32
    %c0_i32 = arith.constant 0 : i32
    %2 = arith.maxsi %1, %c0_i32 : i32
    %c0_i32_1 = arith.constant 0 : i32
    %c0_i32_2 = arith.constant 0 : i32
    %c0_i32_3 = arith.constant 0 : i32
    return %c0_i32_1, %2, %c0_i32_2 : i32, i32, i32
  }
  func.func @transform_2(%arg0: i32) -> (i32, i32, i32) {
    %c1_i32 = arith.constant 1 : i32
    %0 = arith.addi %arg0, %c1_i32 : i32
    %c1_i32_0 = arith.constant 1 : i32
    %1 = arith.muli %0, %c1_i32_0 : i32
    %c1_i32_1 = arith.constant 1 : i32
    %2 = arith.minsi %1, %c1_i32_1 : i32
    %c0_i32 = arith.constant 0 : i32
    %c0_i32_2 = arith.constant 0 : i32
    %c0_i32_3 = arith.constant 0 : i32
    return %c0_i32, %2, %c0_i32_2 : i32, i32, i32
  }
  func.func @transform_3(%arg0: i32) -> (i32, i32) {
    %c0_i32 = arith.constant 0 : i32
    %c0_i32_0 = arith.constant 0 : i32
    return %arg0, %c0_i32 : i32, i32
  }
}

</mosaic_0001>

<llo_original>
// kernel: tpu_custom_call.1
$region0: #{tpu_custom_call.1}
  #allocation0 [shape = 'u32[]', space=smem, size = 0x4, offset = 0x4, fixed_abs, tag = 'smem constant byte address 0x4 - core index']
  #allocation1 [shape = 'u32[144,128]{1,0:T(1,128)}', space=vmem, size = 0x12000, scoped, tag = 'internal scratch']
  #allocation2 [shape = 'f32[10,128]{1,0:T(8,128)}', space=vmem, size = 0x2000, scoped, tag = 'scratch operand']
  %s0 = inlined_call_operand.hbm [shape: f32[3,16,16], index: 0, kind: input, shape index: {}]
  %s1 = inlined_call_operand.hbm [shape: f32[3,16,16], index: 1, kind: input, shape index: {}]
  %s2 = inlined_call_operand.hbm [shape: f32[3,16,16], index: 2, kind: input, shape index: {}]
  %s3 = inlined_call_operand.hbm [shape: f32[16,16], index: 3, kind: output, shape index: {}]
  %s4 = sld [smem:[#allocation0]]
  $region57: #{tpu_custom_call.1} parent=0
    _
  %s6 = ssub.s32 1, %s4
  %s7 = scalar_select 0, %s6, %s4
  $region1: #{tpu_custom_call.1} parent=0
    #allocation3 [shape = 'u8[24576]{0}', space=vmem, size = 0x6000, scoped, tag = 'input window, operand 0']
    #allocation4 [shape = 's32[2]{0}', space=sflag, size = 0x8, scoped, tag = 'scoped memory for tpu_custom_call.1']
    #allocation5 [shape = 's32[2]{0}', space=sflag, size = 0x8, scoped, tag = 'scoped memory for tpu_custom_call.1']
    #allocation6 [shape = 'u8[24576]{0}', space=vmem, size = 0x6000, scoped, tag = 'input window, operand 1']
    #allocation7 [shape = 's32[2]{0}', space=sflag, size = 0x8, scoped, tag = 'scoped memory for tpu_custom_call.1']
    #allocation8 [shape = 'u8[24576]{0}', space=vmem, size = 0x6000, scoped, tag = 'input window, operand 2']
    #allocation9 [shape = 'u8[8192]{0}', space=vmem, size = 0x2000, scoped, tag = 'output window, operand 0']
    %8 = vsyncpa [#allocation4], 0
    %s9 = scalar_lea.sflag [#allocation4], 1
    %10 = vsyncpa %s9, 0
    %11 = vsyncpa [#allocation7], 0
    %s12 = scalar_lea.sflag [#allocation7], 1
    %13 = vsyncpa %s12, 0
    %14 = vsyncpa [#allocation5], 0
    %s15 = scalar_lea.sflag [#allocation5], 1
    %16 = vsyncpa %s15, 0
    loop: start=0, step=1, limit=4
    $region2: #{tpu_custom_call.1} parent=1 // loop_pre_header
      _
    $region3: #{tpu_custom_call.1} parent=1 // loop_header
      %s18 = sphi 0, %s22
      %p19 = scmp.ge.s32.totalorder %s18, 4
      %s28 = sphi 0, %s30
      %s31 = sphi 0, %s28
      %s32 = sphi 0, %s31
      %s48 = sphi 0, %s32
      %s60 = sphi 0, %s62
      %s63 = sphi 0, %s60
      %s64 = sphi 0, %s63
      %s80 = sphi 0, %s64
      %s92 = sphi 0, %s94
      %s95 = sphi 0, %s92
      %s96 = sphi 0, %s95
      %s112 = sphi 0, %s96
      %s118 = sphi 0, %s120
      %s121 = sphi 0, %s118
      %s122 = sphi 0, %s121
      %s138 = sphi 0, %s122
    $region4: #{tpu_custom_call.1} parent=1 // loop_header_branch
      %21 = sbr.rel (%p19) target = $region8
    $region5: #{tpu_custom_call.1} parent=1 // loop_body
      %s23 = ssub.s32 %s18, 1
      %s24 = ssub.s32 %s18, 2
      %s25 = sadd.s32 %s18, 1
      %s26 = ssub.s32 %s18, %s25
      %p27 = scmp.eq.s32.totalorder %s26, 0
      %s29 = sadd.s32 %s28, 1
      %s30 = scalar_select %p27, %s28, %s29
      %p33 = pneg %p27
      %p34 = scmp.eq.s32.totalorder %s18, 1
      %p35 = por %p33, %p34
      %p36 = scmp.ne.s32.totalorder %s28, %s31
      %p37 = scmp.eq.s32.totalorder %s18, 0
      %p38 = por %p36, %p37
      %p39 = scmp.ne.s32.totalorder %s28, %s31
      %p40 = scmp.eq.s32.totalorder %s23, 1
      %p41 = por %p39, %p40
      %p42 = scmp.ne.s32.totalorder %s31, %s32
      %p43 = scmp.eq.s32.totalorder %s23, 0
      %p44 = por %p42, %p43
      %p45 = scmp.ne.s32.totalorder %s31, %s32
      %p46 = scmp.eq.s32.totalorder %s24, 1
      %p47 = por %p45, %p46
      %p49 = scmp.ne.s32.totalorder %s32, %s48
      %p50 = scmp.eq.s32.totalorder %s24, 0
      %p51 = por %p49, %p50
      %s52 = ssub.s32 %s18, 1
      %p53 = scmp.gt.s32.totalorder %s52, 0
      %s54 = scalar_select %p53, %s52, 0
      %s55 = ssub.s32 %s25, 1
      %p56 = scmp.gt.s32.totalorder %s55, 0
      %s57 = scalar_select %p56, %s55, 0
      %s58 = ssub.s32 %s54, %s57
      %p59 = scmp.eq.s32.totalorder %s58, 0
      %s61 = sadd.s32 %s60, 1
      %s62 = scalar_select %p59, %s60, %s61
      %p65 = pneg %p59
      %p66 = scmp.eq.s32.totalorder %s18, 1
      %p67 = por %p65, %p66
      %p68 = scmp.ne.s32.totalorder %s60, %s63
      %p69 = scmp.eq.s32.totalorder %s18, 0
      %p70 = por %p68, %p69
      %p71 = scmp.ne.s32.totalorder %s60, %s63
      %p72 = scmp.eq.s32.totalorder %s23, 1
      %p73 = por %p71, %p72
      %p74 = scmp.ne.s32.totalorder %s63, %s64
      %p75 = scmp.eq.s32.totalorder %s23, 0
      %p76 = por %p74, %p75
      %p77 = scmp.ne.s32.totalorder %s63, %s64
      %p78 = scmp.eq.s32.totalorder %s24, 1
      %p79 = por %p77, %p78
      %p81 = scmp.ne.s32.totalorder %s64, %s80
      %p82 = scmp.eq.s32.totalorder %s24, 0
      %p83 = por %p81, %p82
      %s84 = sadd.s32 %s18, 1
      %p85 = scmp.lt.s32.totalorder %s84, 1
      %s86 = scalar_select %p85, %s84, 1
      %s87 = sadd.s32 %s25, 1
      %p88 = scmp.lt.s32.totalorder %s87, 1
      %s89 = scalar_select %p88, %s87, 1
      %s90 = ssub.s32 %s86, %s89
      %p91 = scmp.eq.s32.totalorder %s90, 0
      %s93 = sadd.s32 %s92, 1
      %s94 = scalar_select %p91, %s92, %s93
      %p97 = pneg %p91
      %p98 = scmp.eq.s32.totalorder %s18, 1
      %p99 = por %p97, %p98
      %p100 = scmp.ne.s32.totalorder %s92, %s95
      %p101 = scmp.eq.s32.totalorder %s18, 0
      %p102 = por %p100, %p101
      %p103 = scmp.ne.s32.totalorder %s92, %s95
      %p104 = scmp.eq.s32.totalorder %s23, 1
      %p105 = por %p103, %p104
      %p106 = scmp.ne.s32.totalorder %s95, %s96
      %p107 = scmp.eq.s32.totalorder %s23, 0
      %p108 = por %p106, %p107
      %p109 = scmp.ne.s32.totalorder %s95, %s96
      %p110 = scmp.eq.s32.totalorder %s24, 1
      %p111 = por %p109, %p110
      %p113 = scmp.ne.s32.totalorder %s96, %s112
      %p114 = scmp.eq.s32.totalorder %s24, 0
      %p115 = por %p113, %p114
      %s116 = ssub.s32 %s18, %s25
      %p117 = scmp.eq.s32.totalorder %s116, 0
      %s119 = sadd.s32 %s118, 1
      %s120 = scalar_select %p117, %s118, %s119
      %p123 = pneg %p117
      %p124 = scmp.eq.s32.totalorder %s18, 1
      %p125 = por %p123, %p124
      %p126 = scmp.ne.s32.totalorder %s118, %s121
      %p127 = scmp.eq.s32.totalorder %s18, 0
      %p128 = por %p126, %p127
      %p129 = scmp.ne.s32.totalorder %s118, %s121
      %p130 = scmp.eq.s32.totalorder %s23, 1
      %p131 = por %p129, %p130
      %p132 = scmp.ne.s32.totalorder %s121, %s122
      %p133 = scmp.eq.s32.totalorder %s23, 0
      %p134 = por %p132, %p133
      %p135 = scmp.ne.s32.totalorder %s121, %s122
      %p136 = scmp.eq.s32.totalorder %s24, 1
      %p137 = por %p135, %p136
      %p139 = scmp.ne.s32.totalorder %s122, %s138
      %p140 = scmp.eq.s32.totalorder %s24, 0
      %p141 = por %p139, %p140
      %p142 = scmp.le.s32.totalorder 1, %s18
      %p143 = scmp.lt.s32.totalorder %s18, 3
      %p144 = pnand %p142, %p143
      %p145 = pneg %p144
      // Predicated region
      $region9: #{tpu_custom_call.1} parent=5 // pred_check
        _
      $region10: #{tpu_custom_call.1} parent=5 // pred_check_branch
        %147 = sbr.rel (%p144) target = $region12
      $region11: #{tpu_custom_call.1} parent=5 // pred_region
        %s148 = ssub.s32 %s18, 1
      $region12: #{tpu_custom_call.1} parent=5 // pred_fallthru
        _
      %p149 = scmp.lt.s32.totalorder %s18, 2
      // Predicated region
      $region13: #{tpu_custom_call.1} parent=5 // pred_check
        %p150 = pneg %p149
      $region14: #{tpu_custom_call.1} parent=5 // pred_check_branch
        %152 = sbr.rel (%p150) target = $region16
      $region15: #{tpu_custom_call.1} parent=5 // pred_region
        // Predicated region
        $region17: #{tpu_custom_call.1} parent=15 // pred_check
          %p153 = pneg %p38
        $region18: #{tpu_custom_call.1} parent=15 // pred_check_branch
          %155 = sbr.rel (%p153) target = $region20
        $region19: #{tpu_custom_call.1} parent=15 // pred_region
          %s156 = sand.u32 %s28, 1
          %s157 = scalar_lea.sflag [#allocation4], %s156
          %s158 = sand.u32 %s28, 1
          %s159 = smul.addr %s158, 24
          %s160 = scalar_lea.vmem [#allocation3], %s159
          %s162 = ssub.s32 384, 384
          %163 = vsyncadd %s157, %s162
          %s164 = smul.addr %s18, 128
          %s165 = scalar_lea.hbm %s0, %s164
          %s166 = sshll.u32 %s160, 4
          %s167 = int_to_ptr.vmem [resolvable:$true] %s166
          %172 = dma.hbm_to_vmem [thread:$0]  %s165, 384, %s167, %s157, 256, 128, 8
        $region20: #{tpu_custom_call.1} parent=15 // pred_fallthru
          _
        // Predicated region
        $region21: #{tpu_custom_call.1} parent=15 // pred_check
          %p173 = pneg %p70
        $region22: #{tpu_custom_call.1} parent=15 // pred_check_branch
          %175 = sbr.rel (%p173) target = $region24
        $region23: #{tpu_custom_call.1} parent=15 // pred_region
          %s176 = sand.u32 %s18, 1
          %s177 = scalar_lea.sflag [#allocation7], %s176
          %s178 = sand.u32 %s60, 1
          %s179 = smul.addr %s178, 24
          %s180 = scalar_lea.vmem [#allocation6], %s179
          %s181 = ssub.s32 %s18, 1
          %p182 = scmp.gt.s32.totalorder %s181, 0
          %s183 = scalar_select %p182, %s181, 0
          %s185 = ssub.s32 384, 384
          %186 = vsyncadd %s177, %s185
          %s187 = smul.addr %s183, 128
          %s188 = scalar_lea.hbm %s1, %s187
          %s189 = sshll.u32 %s180, 4
          %s190 = int_to_ptr.vmem [resolvable:$true] %s189
          %195 = dma.hbm_to_vmem [thread:$0]  %s188, 384, %s190, %s177, 256, 128, 8
        $region24: #{tpu_custom_call.1} parent=15 // pred_fallthru
          _
        // Predicated region
        $region25: #{tpu_custom_call.1} parent=15 // pred_check
          %p196 = pneg %p102
        $region26: #{tpu_custom_call.1} parent=15 // pred_check_branch
          %198 = sbr.rel (%p196) target = $region28
        $region27: #{tpu_custom_call.1} parent=15 // pred_region
          %s199 = sand.u32 %s18, 1
          %s200 = scalar_lea.sflag [#allocation7], %s199
          %s201 = sand.u32 %s92, 1
          %s202 = smul.addr %s201, 24
          %s203 = scalar_lea.vmem [#allocation8], %s202
          %s204 = sadd.s32 %s18, 1
          %p205 = scmp.lt.s32.totalorder %s204, 1
          %s206 = scalar_select %p205, %s204, 1
          %s208 = ssub.s32 384, 384
          %209 = vsyncadd %s200, %s208
          %s210 = smul.addr %s206, 128
          %s211 = scalar_lea.hbm %s2, %s210
          %s212 = sshll.u32 %s203, 4
          %s213 = int_to_ptr.vmem [resolvable:$true] %s212
          %218 = dma.hbm_to_vmem [thread:$0]  %s211, 384, %s213, %s200, 256, 128, 8
        $region28: #{tpu_custom_call.1} parent=15 // pred_fallthru
          _
      $region16: #{tpu_custom_call.1} parent=5 // pred_fallthru
        _
      %p219 = scmp.le.s32.totalorder 1, %s18
      %p220 = scmp.lt.s32.totalorder %s18, 3
      %p221 = pnand %p219, %p220
      %p222 = pneg %p221
      // Predicated region
      $region29: #{tpu_custom_call.1} parent=5 // pred_check
        _
      $region30: #{tpu_custom_call.1} parent=5 // pred_check_branch
        %224 = sbr.rel (%p221) target = $region32
      $region31: #{tpu_custom_call.1} parent=5 // pred_region
        %s225 = ssub.s32 %s18, 1
        %s226 = sand.u32 %s31, 1
        %s227 = scalar_lea.sflag [#allocation4], %s226
        %s228 = sand.u32 %s31, 1
        %s229 = smul.addr %s228, 24
        %s230 = scalar_lea.vmem [#allocation3], %s229
        // Predicated region
        $region33: #{tpu_custom_call.1} parent=31 // pred_check
          %p231 = pneg %p44
        $region34: #{tpu_custom_call.1} parent=31 // pred_check_branch
          %233 = sbr.rel (%p231) target = $region36
        $region35: #{tpu_custom_call.1} parent=31 // pred_region
          %234 = dma.done %s227, 384
        $region36: #{tpu_custom_call.1} parent=31 // pred_fallthru
          _
        %s235 = sand.u32 %s23, 1
        %s236 = scalar_lea.sflag [#allocation7], %s235
        %s237 = sand.u32 %s63, 1
        %s238 = smul.addr %s237, 24
        %s239 = scalar_lea.vmem [#allocation6], %s238
        // Predicated region
        $region37: #{tpu_custom_call.1} parent=31 // pred_check
          %p240 = pneg %p76
        $region38: #{tpu_custom_call.1} parent=31 // pred_check_branch
          %242 = sbr.rel (%p240) target = $region40
        $region39: #{tpu_custom_call.1} parent=31 // pred_region
          %243 = dma.done %s236, 384
        $region40: #{tpu_custom_call.1} parent=31 // pred_fallthru
          _
        %s244 = sand.u32 %s23, 1
        %s245 = scalar_lea.sflag [#allocation7], %s244
        %s246 = sand.u32 %s95, 1
        %s247 = smul.addr %s246, 24
        %s248 = scalar_lea.vmem [#allocation8], %s247
        // Predicated region
        $region41: #{tpu_custom_call.1} parent=31 // pred_check
          %p249 = pneg %p108
        $region42: #{tpu_custom_call.1} parent=31 // pred_check_branch
          %251 = sbr.rel (%p249) target = $region44
        $region43: #{tpu_custom_call.1} parent=31 // pred_region
          %252 = dma.done %s245, 384
        $region44: #{tpu_custom_call.1} parent=31 // pred_fallthru
          _
        %s253 = sand.u32 %s31, 1
        %s254 = scalar_lea.sflag [#allocation4], %s253
        %s255 = sand.u32 %s31, 1
        %s256 = smul.addr %s255, 24
        %s257 = scalar_lea.vmem [#allocation3], %s256
        %p258 = pneg %p44
        %p259 = pneg %p41
        %s260 = sand.u32 %s23, 1
        %s261 = scalar_lea.sflag [#allocation7], %s260
        %s262 = sand.u32 %s63, 1
        %s263 = smul.addr %s262, 24
        %s264 = scalar_lea.vmem [#allocation6], %s263
        %p265 = pneg %p76
        %p266 = pneg %p73
        %s267 = sand.u32 %s23, 1
        %s268 = scalar_lea.sflag [#allocation7], %s267
        %s269 = sand.u32 %s95, 1
        %s270 = smul.addr %s269, 24
        %s271 = scalar_lea.vmem [#allocation8], %s270
        %p272 = pneg %p108
        %p273 = pneg %p105
        %p274 = pneg %p134
        %p275 = pneg %p131
        %s276 = sand.u32 %s121, 1
        %s277 = scalar_lea.sflag [#allocation5], %s276
        %s278 = sand.u32 %s121, 1
        %s279 = smul.addr %s278, 8
        %s280 = scalar_lea.vmem [#allocation9], %s279
        %s281 = ssub.s32 %s23, 1
        %p282 = scmp.gt.s32.totalorder %s281, 0
        %s283 = scalar_select %p282, %s281, 0
        %s284 = sadd.s32 %s23, 1
        %p285 = scmp.lt.s32.totalorder %s284, 1
        %s286 = scalar_select %p285, %s284, 1
        %v287 = vld [vmem:[%s230] sm:$0xff]
        %v288 = vmul.f32 %v287, 0.299
        %s289 = scalar_lea.vmem %s230, 8 [#allocation3]
        %v290 = vld [vmem:[%s289] sm:$0xff]
        %v291 = vmul.f32 %v290, 0.587
        %v292 = vadd.f32 %v288, %v291
        %s293 = scalar_lea.vmem %s230, 16 [#allocation3]
        %v294 = vld [vmem:[%s293] sm:$0xff]
        %v295 = vmul.f32 %v294, 0.114
        %v296 = vadd.f32 %v292, %v295
        %v297 = vld [vmem:[%s239 + $0x7] sm:$0x1]
        %v298 = vmul.f32 %v297, 0.299
        %s299 = scalar_lea.vmem %s239, 8 [#allocation6]
        %v300 = vld [vmem:[%s299 + $0x7] sm:$0x1]
        %v301 = vmul.f32 %v300, 0.587
        %v302 = vadd.f32 %v298, %v301
        %s303 = scalar_lea.vmem %s239, 16 [#allocation6]
        %v304 = vld [vmem:[%s303 + $0x7] sm:$0x1]
        %v305 = vmul.f32 %v304, 0.114
        %v306 = vadd.f32 %v302, %v305
        %v307 = vld [vmem:[%s248] sm:$0x1]
        %v308 = vmul.f32 %v307, 0.299
        %s309 = scalar_lea.vmem %s248, 8 [#allocation8]
        %v310 = vld [vmem:[%s309] sm:$0x1]
        %v311 = vmul.f32 %v310, 0.587
        %v312 = vadd.f32 %v308, %v311
        %s313 = scalar_lea.vmem %s248, 16 [#allocation8]
        %v314 = vld [vmem:[%s313] sm:$0x1]
        %v315 = vmul.f32 %v314, 0.114
        %v316 = vadd.f32 %v312, %v315
        %p317 = scmp.gt.s32.totalorder %s23, 0
        %s318 = scalar_select %p317, 1, 0
        %v319 = vstv %s318
        %vm320 = vcmp.eq.s32.totalorder %v319, 1
        %v321 = vsel %vm320, %v306, 0.0
        %p322 = scmp.lt.s32.totalorder %s23, 1
        %s323 = scalar_select %p322, 1, 0
        %v324 = vstv %s323
        %vm325 = vcmp.eq.s32.totalorder %v324, 1
        %v326 = vsel %vm325, %v316, 0.0
        %vm327 = vcmask 1047680
        %328 = vst.msk [vmem:[#allocation2] sm:$0xff] %vm327, 0.0
        %vm329 = vcmask 1041536
        %330 = vst.msk [vmem:[#allocation2 + $0x8] sm:$0x3] %vm329, 0.0
        %vm331 = vcmask 122880
        %332 = vst.msk [vmem:[#allocation2] sm:$0x1] %vm331, %v321
        %vm333 = vcmask 130048
        %334 = vst.msk [vmem:[#allocation2 + $0x1] sm:$0xff] %vm333, %v296
        %335 = vst.msk [vmem:[#allocation2 + $0x9] sm:$0x1] %vm331, %v326
        %v336 = vld [vmem:[#allocation2] sm:$0xff]
        %v337 = vld [vmem:[#allocation2 + $0x1] sm:$0xff]
        %v338 = vadd.f32 %v336, %v337
        %v339 = vld [vmem:[#allocation2 + $0x2] sm:$0xff]
        %v340 = vadd.f32 %v338, %v339
        %341 = vrot.lane.b32.xlu0 %v340, 1
        %v342 = vpop.permute.xlu0 %341
        %v343 = vadd.f32 %v340, %v342
        %344 = vrot.lane.b32.xlu0 %v340, 127
        %v345 = vpop.permute.xlu0 %344
        %v346 = vadd.f32 %v343, %v345
        %347 = vst.msk [vmem:[%s280] sm:$0xff] %vm333, %v346
        %s348 = sand.u32 %s121, 1
        %s349 = scalar_lea.sflag [#allocation5], %s348
        %s350 = sand.u32 %s121, 1
        %s351 = smul.addr %s350, 8
        %s352 = scalar_lea.vmem [#allocation9], %s351
        // Predicated region
        $region45: #{tpu_custom_call.1} parent=31 // pred_check
          %p353 = pneg %p131
        $region46: #{tpu_custom_call.1} parent=31 // pred_check_branch
          %355 = sbr.rel (%p353) target = $region48
        $region47: #{tpu_custom_call.1} parent=31 // pred_region
          %s357 = ssub.s32 128, 128
          %358 = vsyncadd %s349, %s357
          %s359 = smul.addr %s23, 128
          %s360 = scalar_lea.hbm %s3, %s359
          %s362 = sshll.u32 %s352, 4
          %s363 = int_to_ptr.vmem [resolvable:$true] %s362
          %365 = dma.vmem_to_hbm [thread:$0]  %s363, 128, %s360, %s349
        $region48: #{tpu_custom_call.1} parent=31 // pred_fallthru
          _
      $region32: #{tpu_custom_call.1} parent=5 // pred_fallthru
        _
      %p366 = scmp.le.s32.totalorder 2, %s18
      // Predicated region
      $region49: #{tpu_custom_call.1} parent=5 // pred_check
        %p367 = pneg %p366
      $region50: #{tpu_custom_call.1} parent=5 // pred_check_branch
        %369 = sbr.rel (%p367) target = $region52
      $region51: #{tpu_custom_call.1} parent=5 // pred_region
        %s370 = ssub.s32 %s18, 2
        // Predicated region
        $region53: #{tpu_custom_call.1} parent=51 // pred_check
          %p371 = pneg %p137
        $region54: #{tpu_custom_call.1} parent=51 // pred_check_branch
          %373 = sbr.rel (%p371) target = $region56
        $region55: #{tpu_custom_call.1} parent=51 // pred_region
          %s374 = sand.u32 %s122, 1
          %s375 = scalar_lea.sflag [#allocation5], %s374
          %s376 = sand.u32 %s122, 1
          %s377 = smul.addr %s376, 8
          %s378 = scalar_lea.vmem [#allocation9], %s377
          %379 = dma.done %s375, 128
        $region56: #{tpu_custom_call.1} parent=51 // pred_fallthru
          _
      $region52: #{tpu_custom_call.1} parent=5 // pred_fallthru
        _
    $region6: #{tpu_custom_call.1} parent=1 // loop_footer
      %s22 = sadd.s32 1, %s18
    $region7: #{tpu_custom_call.1} parent=1 // loop_footer_branch
      %17 = sbr.rel target = $region3
    $region8: #{tpu_custom_call.1} parent=1 // loop_exit
      _
    %380 = vsyncpa [#allocation4], 1
    %s381 = scalar_lea.sflag [#allocation4], 1
    %382 = vsyncpa %s381, 1
    %383 = vsyncpa [#allocation7], 1
    %s384 = scalar_lea.sflag [#allocation7], 1
    %385 = vsyncpa %s384, 1
    %386 = vsyncpa [#allocation5], 1
    %s387 = scalar_lea.sflag [#allocation5], 1
    %388 = vsyncpa %s387, 1

</llo_original>
